<compile_context>
chip_gen: v5e
topology: v5e:2x2
jax: 0.10.0
libtpu: 0.0.40
codegen_flags: <defaults>
</compile_context>

<pallas_src>
import functools

import jax
import jax.numpy as jnp
import numpy as np
from jax.experimental import pallas as pl
from jax.experimental.pallas import tpu as pltpu

POOL_K = 3
POOL_S = 2
DROP_P = 0.5


def _layer3_kernel(*refs, use_dropout, keep_thr, inv_keep):
    if use_dropout:
        x_ref, scol_ref, rbits_ref, o_ref, col_ref = refs
    else:
        x_ref, scol_ref, o_ref, col_ref = refs

    tc, H, W = x_ref.shape
    _, Hout, Wout = o_ref.shape

    x = x_ref[...]                                                    # (TC, H, W)

    # 3-wide window max along W (lane axis) via shifted slices.
    cw = jnp.maximum(jnp.maximum(x[:, :, 0:W - 2], x[:, :, 1:W - 1]), x[:, :, 2:W])

    # Stride-2 column subsample with a 0/1 selection matmul on the lane axis.
    # Exact: each output element is value*1.0 plus zeros, accumulated in f32.
    cw2 = cw.reshape(tc * H, W - 2)                                   # clean collapse (H mult of 8 in practice)
    colsel = jnp.dot(cw2, scol_ref[...],
                     precision=jax.lax.Precision.HIGHEST,
                     preferred_element_type=jnp.float32)              # (TC*H, Wout)
    col_ref[...] = colsel.reshape(tc, H, Wout)

    # 3-tall window max along H with the stride-2 row subsample folded into
    # sublane-strided loads from the VMEM scratch (no row-selection matmul).
    r0 = col_ref[:, pl.ds(0, Hout, stride=POOL_S), :]
    r1 = col_ref[:, pl.ds(1, Hout, stride=POOL_S), :]
    r2 = col_ref[:, pl.ds(2, Hout, stride=POOL_S), :]
    pooled = jnp.maximum(jnp.maximum(r0, r1), r2)                     # (TC, Hout, Wout)

    if use_dropout:
        keep = rbits_ref[...] < jnp.uint32(keep_thr)                  # P(keep) = 1 - p
        pooled = jnp.where(keep, pooled * inv_keep, 0.0)

    o_ref[...] = pooled.astype(o_ref.dtype)


def layer3_forward(x, *, seed=0, key=None, training=True, p=DROP_P):
    """x: (B, C, H, W) -> (B, C, Hout, Wout), Hout = (H-3)//2 + 1 (VALID pooling)."""
    B, C, H, W = x.shape
    Hout = (H - POOL_K) // POOL_S + 1
    Wout = (W - POOL_K) // POOL_S + 1
    N = B * C
    xf = x.reshape(N, H, W)

    use_dropout = bool(training) and p > 0.0
    elt = x.dtype.itemsize

    # Planes per grid step: as many as fit a conservative VMEM budget
    # (double-buffered input/output/bits + scratch), capped at 512.
    per_plane = (2 * H * W * elt + 2 * Hout * Wout * elt
                 + (2 * Hout * Wout * 4 if use_dropout else 0)
                 + H * Wout * 4)
    budget = 24 * 1024 * 1024                       # safe on v5e/v6e (128 MiB) and v7x (64 MiB)
    TC = int(max(1, min(N, 512, budget // max(per_plane, 1))))
    N_pad = ((N + TC - 1) // TC) * TC
    if N_pad != N:
        xf = jnp.pad(xf, ((0, N_pad - N), (0, 0), (0, 0)))

    # 0/1 selection matrix implementing the stride-2 subsample of column-window maxes.
    scol = (jnp.arange(W - 2)[:, None] == POOL_S * jnp.arange(Wout)[None, :]).astype(x.dtype)

    in_specs = [
        pl.BlockSpec((TC, H, W), lambda i: (i, 0, 0)),        # batch of planes
        pl.BlockSpec((W - 2, Wout), lambda i: (0, 0)),        # column selector (resident)
    ]
    args = [xf, scol]

    keep_thr = 0
    inv_keep = 1.0
    if use_dropout:
        if key is None:
            key = jax.random.PRNGKey(seed)
        rbits = jax.random.bits(key, (N_pad, Hout, Wout), dtype=jnp.uint32)
        in_specs.append(pl.BlockSpec((TC, Hout, Wout), lambda i: (i, 0, 0)))
        args.append(rbits)
        keep_thr = min(2 ** 32 - 1, int(round((1.0 - p) * 2 ** 32)))
        inv_keep = 1.0 / (1.0 - p)

    kernel = functools.partial(_layer3_kernel, use_dropout=use_dropout,
                               keep_thr=keep_thr, inv_keep=inv_keep)

    flops = int(N_pad * (5 * H * W + 2 * H * (W - 2) * Wout))
    bytes_accessed = int(elt * N_pad * (H * W + Hout * Wout)
                         + (4 * N_pad * Hout * Wout if use_dropout else 0))

    out = pl.pallas_call(
        kernel,
        out_shape=jax.ShapeDtypeStruct((N_pad, Hout, Wout), x.dtype),
        grid=(N_pad // TC,),
        in_specs=in_specs,
        out_specs=pl.BlockSpec((TC, Hout, Wout), lambda i: (i, 0, 0)),
        scratch_shapes=[pltpu.VMEM((TC, H, Wout), jnp.float32)],
        compiler_params=pltpu.CompilerParams(
            dimension_semantics=("parallel",),            # independent planes: shard across v7x's 2 TCs
            vmem_limit_bytes=32 * 1024 * 1024,
        ),
        cost_estimate=pl.CostEstimate(flops=flops, transcendentals=0,
                                      bytes_accessed=bytes_accessed),
    )(*args)

    return out[:N].reshape(B, C, Hout, Wout)


if __name__ == "__main__":
    key = jax.random.PRNGKey(0)
    x = jax.random.normal(key, (2, 4, 16, 16), dtype=jnp.float32)

    # Eval path (dropout = identity): must match VALID 3x3 / stride-2 max pooling.
    y_eval = jax.block_until_ready(layer3_forward(x, training=False))
    ref = jax.lax.reduce_window(
        x, -jnp.inf, jax.lax.max,
        window_dimensions=(1, 1, POOL_K, POOL_K),
        window_strides=(1, 1, POOL_S, POOL_S),
        padding="VALID")
    np.testing.assert_allclose(np.asarray(y_eval), np.asarray(ref), rtol=1e-6, atol=1e-6)

    # Train path (module default training=True): maxpool followed by Dropout(0.5).
    y_train = jax.block_until_ready(layer3_forward(x, seed=1234, training=True))
    assert y_train.shape == (2, 4, 7, 7)
    yt = np.asarray(y_train)
    ye = np.asarray(ref)
    # Every output element is either dropped (0) or the pooled value scaled by 1/(1-p)=2.
    ok = np.isclose(yt, 0.0, atol=1e-6) | np.isclose(yt, 2.0 * ye, rtol=1e-5, atol=1e-6)
    assert bool(ok.all())
    drop_frac = float((yt == 0.0).mean())
    assert 0.2 < drop_frac < 0.8

    print("KERNEL_OK")
</pallas_src>

<mosaic_0001>
module attributes {stable_mosaic.version = 11 : i64} {
  func.func @_layer3_kernel(%arg0: i32, %arg1: memref<8x16x16xf32, #tpu.memory_space<vmem>>, %arg2: memref<14x7xf32, #tpu.memory_space<vmem>>, %arg3: memref<8x7x7xf32, #tpu.memory_space<vmem>>, %arg4: memref<8x16x7xf32, #tpu.memory_space<vmem>>) attributes {dimension_semantics = [#tpu.dimension_semantics<parallel>], iteration_bounds = array<i64: 1>, scalar_prefetch = 0 : i64, scratch_operands = 1 : i64, tpu.core_type = #tpu.core_type<tc>, window_params = [{transform_indices = @transform_0, window_bounds = array<i64: 8, 16, 16>}, {pipeline_mode = #tpu.pipeline_mode<synchronous>, transform_indices = @transform_1, window_bounds = array<i64: 14, 7>}, {transform_indices = @transform_2, window_bounds = array<i64: 8, 7, 7>}]} {
    %c0 = arith.constant 0 : index
    %c0_0 = arith.constant 0 : index
    %c0_1 = arith.constant 0 : index
    %0 = vector.load %arg1[%c0, %c0_0, %c0_1] : memref<8x16x16xf32, #tpu.memory_space<vmem>>, vector<8x16x16xf32>
    %1 = vector.extract_strided_slice %0 {offsets = [0, 0, 0], sizes = [8, 16, 14], strides = [1, 1, 1]} : vector<8x16x16xf32> to vector<8x16x14xf32>
    %2 = vector.extract_strided_slice %0 {offsets = [0, 0, 1], sizes = [8, 16, 14], strides = [1, 1, 1]} : vector<8x16x16xf32> to vector<8x16x14xf32>
    %3 = arith.maximumf %1, %2 : vector<8x16x14xf32>
    %4 = vector.extract_strided_slice %0 {offsets = [0, 0, 2], sizes = [8, 16, 14], strides = [1, 1, 1]} : vector<8x16x16xf32> to vector<8x16x14xf32>
    %5 = arith.maximumf %3, %4 : vector<8x16x14xf32>
    %6 = vector.shape_cast %5 : vector<8x16x14xf32> to vector<128x14xf32>
    %c0_2 = arith.constant 0 : index
    %c0_3 = arith.constant 0 : index
    %7 = vector.load %arg2[%c0_2, %c0_3] : memref<14x7xf32, #tpu.memory_space<vmem>>, vector<14x7xf32>
    %cst = arith.constant dense<0.000000e+00> : vector<128x7xf32>
    %8 = tpu.matmul %6, %7, %cst {dimension_numbers = #tpu.dot_dimension_numbers<[1], [0], [0], [1], [0, 0, 1, 1], [], []>, precision = #tpu.contract_precision<fp32>} : vector<128x14xf32>, vector<14x7xf32>, vector<128x7xf32> -> vector<128x7xf32>
    %9 = vector.shape_cast %8 : vector<128x7xf32> to vector<8x16x7xf32>
    %c0_4 = arith.constant 0 : index
    %c0_5 = arith.constant 0 : index
    %c0_6 = arith.constant 0 : index
    %10 = vector.load %arg4[%c0_4, %c0_5, %c0_6] : memref<8x16x7xf32, #tpu.memory_space<vmem>>, vector<8x16x7xf32>
    tpu.vector_store %arg4[%c0_4, %c0_5, %c0_6], %9 {strides = array<i32>} : memref<8x16x7xf32, #tpu.memory_space<vmem>>, vector<8x16x7xf32>,
    %c0_7 = arith.constant 0 : index
    %c0_8 = arith.constant 0 : index
    %c0_9 = arith.constant 0 : index
    %11 = tpu.strided_load %arg4[%c0_7, %c0_8, %c0_9] {strides = array<i32: 1, 2, 1>} : memref<8x16x7xf32, #tpu.memory_space<vmem>>, vector<8x7x7xf32>
    %c0_10 = arith.constant 0 : index
    %c1 = arith.constant 1 : index
    %c0_11 = arith.constant 0 : index
    %12 = tpu.strided_load %arg4[%c0_10, %c1, %c0_11] {strides = array<i32: 1, 2, 1>} : memref<8x16x7xf32, #tpu.memory_space<vmem>>, vector<8x7x7xf32>
    %c0_12 = arith.constant 0 : index
    %c2 = arith.constant 2 : index
    %c0_13 = arith.constant 0 : index
    %13 = tpu.strided_load %arg4[%c0_12, %c2, %c0_13] {strides = array<i32: 1, 2, 1>} : memref<8x16x7xf32, #tpu.memory_space<vmem>>, vector<8x7x7xf32>
    %14 = arith.maximumf %11, %12 : vector<8x7x7xf32>
    %15 = arith.maximumf %14, %13 : vector<8x7x7xf32>
    %c0_14 = arith.constant 0 : index
    %c0_15 = arith.constant 0 : index
    %c0_16 = arith.constant 0 : index
    %16 = vector.load %arg3[%c0_14, %c0_15, %c0_16] : memref<8x7x7xf32, #tpu.memory_space<vmem>>, vector<8x7x7xf32>
    tpu.vector_store %arg3[%c0_14, %c0_15, %c0_16], %15 {strides = array<i32>} : memref<8x7x7xf32, #tpu.memory_space<vmem>>, vector<8x7x7xf32>,
    return
  }
  func.func @transform_0(%arg0: i32) -> (i32, i32, i32) {
    %c0_i32 = arith.constant 0 : i32
    %c0_i32_0 = arith.constant 0 : i32
    %c0_i32_1 = arith.constant 0 : i32
    return %arg0, %c0_i32, %c0_i32_0 : i32, i32, i32
  }
  func.func @transform_1(%arg0: i32) -> (i32, i32) {
    %c0_i32 = arith.constant 0 : i32
    %c0_i32_0 = arith.constant 0 : i32
    %c0_i32_1 = arith.constant 0 : i32
    return %c0_i32, %c0_i32_0 : i32, i32
  }
  func.func @transform_2(%arg0: i32) -> (i32, i32, i32) {
    %c0_i32 = arith.constant 0 : i32
    %c0_i32_0 = arith.constant 0 : i32
    %c0_i32_1 = arith.constant 0 : i32
    return %arg0, %c0_i32, %c0_i32_0 : i32, i32, i32
  }
}

</mosaic_0001>

<llo_original>
// kernel: tpu_custom_call.1
$region0: #{tpu_custom_call.1}
  #allocation0 [shape = 'u32[]', space=smem, size = 0x4, offset = 0x4, fixed_abs, tag = 'smem constant byte address 0x4 - core index']
  #allocation1 [shape = 'u32[72,128]{1,0:T(1,128)}', space=vmem, size = 0x9000, scoped, tag = 'internal scratch']
  #allocation2 [shape = 'f32[8,16,7]{2,1,0:T(8,128)}', space=vmem, size = 0x10000, scoped, tag = 'scratch operand']
  %s0 = inlined_call_operand.hbm [shape: f32[8,16,16], index: 0, kind: input, shape index: {}]
  %s1 = inlined_call_operand.vmem [shape: f32[14,7], index: 1, kind: input, shape index: {}]
  %s2 = inlined_call_operand.vmem [shape: f32[8,7,7], index: 2, kind: output, shape index: {}]
  %s3 = sld [smem:[#allocation0]]
  $region22: #{tpu_custom_call.1} parent=0
    _
  %s5 = ssub.s32 1, %s3
  %s6 = scalar_select 0, %s5, %s3
  $region1: #{tpu_custom_call.1} parent=0
    #allocation3 [shape = 'u8[65536]{0}', space=vmem, size = 0x10000, scoped, tag = 'input window, operand 0, single buffered']
    #allocation4 [shape = 's32[1]{0}', space=sflag, size = 0x4, scoped, tag = 'scoped memory for tpu_custom_call.1']
    %7 = vsyncpa [#allocation4], 0
    // Predicated region
    $region2: #{tpu_custom_call.1} parent=1 // pred_check
      _
    $region3: #{tpu_custom_call.1} parent=1 // pred_check_branch
      %9 = sbr.rel (0) target = $region5
    $region4: #{tpu_custom_call.1} parent=1 // pred_region
      %11 = vsyncadd [#allocation4], 0
      %s12 = sshll.u32 %s0, 4
      %s13 = int_to_ptr.hbm [resolvable:$true] %s12
      %s14 = sshll.u32 [#allocation3], 4
      %s15 = int_to_ptr.vmem [resolvable:$true] %s14
      %20 = dma.hbm_to_vmem [thread:$0]  %s13, 2048, %s15, [#allocation4], 128, 128, 8
    $region5: #{tpu_custom_call.1} parent=1 // pred_fallthru
      _
    // Predicated region
    $region6: #{tpu_custom_call.1} parent=1 // pred_check
      _
    $region7: #{tpu_custom_call.1} parent=1 // pred_check_branch
      %22 = sbr.rel (0) target = $region9
    $region8: #{tpu_custom_call.1} parent=1 // pred_region
      _
    $region9: #{tpu_custom_call.1} parent=1 // pred_fallthru
      _
    // Predicated region
    $region10: #{tpu_custom_call.1} parent=1 // pred_check
      _
    $region11: #{tpu_custom_call.1} parent=1 // pred_check_branch
      %24 = sbr.rel (0) target = $region13
    $region12: #{tpu_custom_call.1} parent=1 // pred_region
      %26 = dma.done [#allocation4], 2048
    $region13: #{tpu_custom_call.1} parent=1 // pred_fallthru
      _
    %v27 = vld [vmem:[#allocation3] sm:$0xff]
    %v28 = vld [vmem:[#allocation3 + $0x8] sm:$0xff]
    %v29 = vld [vmem:[#allocation3 + $0x10] sm:$0xff]
    %v30 = vld [vmem:[#allocation3 + $0x18] sm:$0xff]
    %v31 = vld [vmem:[#allocation3 + $0x20] sm:$0xff]
    %v32 = vld [vmem:[#allocation3 + $0x28] sm:$0xff]
    %v33 = vld [vmem:[#allocation3 + $0x30] sm:$0xff]
    %v34 = vld [vmem:[#allocation3 + $0x38] sm:$0xff]
    %v35 = vld [vmem:[#allocation3 + $0x40] sm:$0xff]
    %v36 = vld [vmem:[#allocation3 + $0x48] sm:$0xff]
    %v37 = vld [vmem:[#allocation3 + $0x50] sm:$0xff]
    %v38 = vld [vmem:[#allocation3 + $0x58] sm:$0xff]
    %v39 = vld [vmem:[#allocation3 + $0x60] sm:$0xff]
    %v40 = vld [vmem:[#allocation3 + $0x68] sm:$0xff]
    %v41 = vld [vmem:[#allocation3 + $0x70] sm:$0xff]
    %v42 = vld [vmem:[#allocation3 + $0x78] sm:$0xff]
    %59 = vrot.lane.b32.xlu0 %v27, 127
    %v60 = vpop.permute.xlu0 %59
    %61 = vrot.lane.b32.xlu0 %v28, 127
    %v62 = vpop.permute.xlu0 %61
    %63 = vrot.lane.b32.xlu0 %v29, 127
    %v64 = vpop.permute.xlu0 %63
    %65 = vrot.lane.b32.xlu0 %v30, 127
    %v66 = vpop.permute.xlu0 %65
    %67 = vrot.lane.b32.xlu0 %v31, 127
    %v68 = vpop.permute.xlu0 %67
    %69 = vrot.lane.b32.xlu0 %v32, 127
    %v70 = vpop.permute.xlu0 %69
    %71 = vrot.lane.b32.xlu0 %v33, 127
    %v72 = vpop.permute.xlu0 %71
    %73 = vrot.lane.b32.xlu0 %v34, 127
    %v74 = vpop.permute.xlu0 %73
    %75 = vrot.lane.b32.xlu0 %v35, 127
    %v76 = vpop.permute.xlu0 %75
    %77 = vrot.lane.b32.xlu0 %v36, 127
    %v78 = vpop.permute.xlu0 %77
    %79 = vrot.lane.b32.xlu0 %v37, 127
    %v80 = vpop.permute.xlu0 %79
    %81 = vrot.lane.b32.xlu0 %v38, 127
    %v82 = vpop.permute.xlu0 %81
    %83 = vrot.lane.b32.xlu0 %v39, 127
    %v84 = vpop.permute.xlu0 %83
    %85 = vrot.lane.b32.xlu0 %v40, 127
    %v86 = vpop.permute.xlu0 %85
    %87 = vrot.lane.b32.xlu0 %v41, 127
    %v88 = vpop.permute.xlu0 %87
    %89 = vrot.lane.b32.xlu0 %v42, 127
    %v90 = vpop.permute.xlu0 %89
    %v107 = vmax.f32 %v27, %v60
    %v108 = vmax.f32 %v28, %v62
    %v109 = vmax.f32 %v29, %v64
    %v110 = vmax.f32 %v30, %v66
    %v111 = vmax.f32 %v31, %v68
    %v112 = vmax.f32 %v32, %v70
    %v113 = vmax.f32 %v33, %v72
    %v114 = vmax.f32 %v34, %v74
    %v115 = vmax.f32 %v35, %v76
    %v116 = vmax.f32 %v36, %v78
    %v117 = vmax.f32 %v37, %v80
    %v118 = vmax.f32 %v38, %v82
    %v119 = vmax.f32 %v39, %v84
    %v120 = vmax.f32 %v40, %v86
    %v121 = vmax.f32 %v41, %v88
    %v122 = vmax.f32 %v42, %v90
    %123 = vrot.lane.b32.xlu0 %v27, 126
    %v124 = vpop.permute.xlu0 %123
    %125 = vrot.lane.b32.xlu0 %v28, 126
    %v126 = vpop.permute.xlu0 %125
    %127 = vrot.lane.b32.xlu0 %v29, 126
    %v128 = vpop.permute.xlu0 %127
    %129 = vrot.lane.b32.xlu0 %v30, 126
    %v130 = vpop.permute.xlu0 %129
    %131 = vrot.lane.b32.xlu0 %v31, 126
    %v132 = vpop.permute.xlu0 %131
    %133 = vrot.lane.b32.xlu0 %v32, 126
    %v134 = vpop.permute.xlu0 %133
    %135 = vrot.lane.b32.xlu0 %v33, 126
    %v136 = vpop.permute.xlu0 %135
    %137 = vrot.lane.b32.xlu0 %v34, 126
    %v138 = vpop.permute.xlu0 %137
    %139 = vrot.lane.b32.xlu0 %v35, 126
    %v140 = vpop.permute.xlu0 %139
    %141 = vrot.lane.b32.xlu0 %v36, 126
    %v142 = vpop.permute.xlu0 %141
    %143 = vrot.lane.b32.xlu0 %v37, 126
    %v144 = vpop.permute.xlu0 %143
    %145 = vrot.lane.b32.xlu0 %v38, 126
    %v146 = vpop.permute.xlu0 %145
    %147 = vrot.lane.b32.xlu0 %v39, 126
    %v148 = vpop.permute.xlu0 %147
    %149 = vrot.lane.b32.xlu0 %v40, 126
    %v150 = vpop.permute.xlu0 %149
    %151 = vrot.lane.b32.xlu0 %v41, 126
    %v152 = vpop.permute.xlu0 %151
    %153 = vrot.lane.b32.xlu0 %v42, 126
    %v154 = vpop.permute.xlu0 %153
    %v171 = vmax.f32 %v107, %v124
    %v172 = vmax.f32 %v108, %v126
    %v173 = vmax.f32 %v109, %v128
    %v174 = vmax.f32 %v110, %v130
    %v175 = vmax.f32 %v111, %v132
    %v176 = vmax.f32 %v112, %v134
    %v177 = vmax.f32 %v113, %v136
    %v178 = vmax.f32 %v114, %v138
    %v179 = vmax.f32 %v115, %v140
    %v180 = vmax.f32 %v116, %v142
    %v181 = vmax.f32 %v117, %v144
    %v182 = vmax.f32 %v118, %v146
    %v183 = vmax.f32 %v119, %v148
    %v184 = vmax.f32 %v120, %v150
    %v185 = vmax.f32 %v121, %v152
    %v186 = vmax.f32 %v122, %v154
    %v187 = vld [vmem:[%s1] sm:$0xff]
    %v188 = vld [vmem:[%s1 + $0x8] sm:$0x3f]
    %vm189 = vcmask 113664
    %v191 = vsel %vm189, %v171, 0
    %v194 = vsel %vm189, %v172, 0
    %v197 = vsel %vm189, %v173, 0
    %v200 = vsel %vm189, %v174, 0
    %v203 = vsel %vm189, %v175, 0
    %v206 = vsel %vm189, %v176, 0
    %v209 = vsel %vm189, %v177, 0
    %v212 = vsel %vm189, %v178, 0
    %v215 = vsel %vm189, %v179, 0
    %v218 = vsel %vm189, %v180, 0
    %v221 = vsel %vm189, %v181, 0
    %v224 = vsel %vm189, %v182, 0
    %v227 = vsel %vm189, %v183, 0
    %v230 = vsel %vm189, %v184, 0
    %v233 = vsel %vm189, %v185, 0
    %v236 = vsel %vm189, %v186, 0
    %vm238 = vcmask 1045504
    %v240 = vsel %vm238, %v188, 0
    %242 = vmatpush.msra.mxu0 0.0
    %243 = vmatpush.msra.mxu0 0.0
    %244 = vmatpush.msra.mxu0 0.0
    %245 = vmatpush.msra.mxu0 0.0
    %246 = vmatpush.msra.mxu0 0.0
    %247 = vmatpush.msra.mxu0 0.0
    %248 = vmatpush.msra.mxu0 0.0
    %249 = vmatpush.msra.mxu0 0.0
    %250 = vmatpush.msra.mxu0 0.0
    %251 = vmatpush.msra.mxu0 0.0
    %252 = vmatpush.msra.mxu0 0.0
    %253 = vmatpush.msra.mxu0 0.0
    %254 = vmatpush.msra.mxu0 0.0
    %255 = vmatpush.msra.mxu0 0.0
    %v256 = vand.u32 %v240, 4294901760
    %257 = vmatpush.msra.mxu0 %v256
    %v258 = vand.u32 %v187, 4294901760
    %259 = vmatpush.msra.mxu0 %v258
    %v260 = vand.u32 %v191, 4294901760
    %v261 = vsub.f32 %v191, %v260
    %v262 = vand.u32 %v261, 4294901760
    %v263 = vsub.f32 %v261, %v262
    %v264 = vand.u32 %v263, 4294901760
    %265 = vmatmul.f32.gmra.mxu0 %v264
    %v266 = vpop.f32.mrf.mxu0
    %v267 = vadd.f32 0.0, %v266
    %v268 = vand.u32 %v194, 4294901760
    %v269 = vsub.f32 %v194, %v268
    %v270 = vand.u32 %v269, 4294901760
    %v271 = vsub.f32 %v269, %v270
    %v272 = vand.u32 %v271, 4294901760
    %273 = vmatmul.f32.gmra.mxu0 %v272
    %v274 = vpop.f32.mrf.mxu0
    %v275 = vadd.f32 0.0, %v274
    %v276 = vand.u32 %v197, 4294901760
    %v277 = vsub.f32 %v197, %v276
    %v278 = vand.u32 %v277, 4294901760
    %v279 = vsub.f32 %v277, %v278
    %v280 = vand.u32 %v279, 4294901760
    %281 = vmatmul.f32.gmra.mxu0 %v280
    %v282 = vpop.f32.mrf.mxu0
    %v283 = vadd.f32 0.0, %v282
    %v284 = vand.u32 %v200, 4294901760
    %v285 = vsub.f32 %v200, %v284
    %v286 = vand.u32 %v285, 4294901760
    %v287 = vsub.f32 %v285, %v286
    %v288 = vand.u32 %v287, 4294901760
    %289 = vmatmul.f32.gmra.mxu0 %v288
    %v290 = vpop.f32.mrf.mxu0
    %v291 = vadd.f32 0.0, %v290
    %v292 = vand.u32 %v203, 4294901760
    %v293 = vsub.f32 %v203, %v292
    %v294 = vand.u32 %v293, 4294901760
    %v295 = vsub.f32 %v293, %v294
    %v296 = vand.u32 %v295, 4294901760
    %297 = vmatmul.f32.gmra.mxu0 %v296
    %v298 = vpop.f32.mrf.mxu0
    %v299 = vadd.f32 0.0, %v298
    %v300 = vand.u32 %v206, 4294901760
    %v301 = vsub.f32 %v206, %v300
    %v302 = vand.u32 %v301, 4294901760
    %v303 = vsub.f32 %v301, %v302
    %v304 = vand.u32 %v303, 4294901760
    %305 = vmatmul.f32.gmra.mxu0 %v304
    %v306 = vpop.f32.mrf.mxu0
    %v307 = vadd.f32 0.0, %v306
    %v308 = vand.u32 %v209, 4294901760
    %v309 = vsub.f32 %v209, %v308
    %v310 = vand.u32 %v309, 4294901760
    %v311 = vsub.f32 %v309, %v310
    %v312 = vand.u32 %v311, 4294901760
    %313 = vmatmul.f32.gmra.mxu0 %v312
    %v314 = vpop.f32.mrf.mxu0
    %v315 = vadd.f32 0.0, %v314
    %v316 = vand.u32 %v212, 4294901760
    %v317 = vsub.f32 %v212, %v316
    %v318 = vand.u32 %v317, 4294901760
    %v319 = vsub.f32 %v317, %v318
    %v320 = vand.u32 %v319, 4294901760
    %321 = vmatmul.f32.gmra.mxu0 %v320
    %v322 = vpop.f32.mrf.mxu0
    %v323 = vadd.f32 0.0, %v322
    %v324 = vand.u32 %v215, 4294901760
    %v325 = vsub.f32 %v215, %v324
    %v326 = vand.u32 %v325, 4294901760
    %v327 = vsub.f32 %v325, %v326
    %v328 = vand.u32 %v327, 4294901760
    %329 = vmatmul.f32.gmra.mxu0 %v328
    %v330 = vpop.f32.mrf.mxu0
    %v331 = vadd.f32 0.0, %v330
    %v332 = vand.u32 %v218, 4294901760
    %v333 = vsub.f32 %v218, %v332
    %v334 = vand.u32 %v333, 4294901760
    %v335 = vsub.f32 %v333, %v334
    %v336 = vand.u32 %v335, 4294901760
    %337 = vmatmul.f32.gmra.mxu0 %v336
    %v338 = vpop.f32.mrf.mxu0
    %v339 = vadd.f32 0.0, %v338
    %v340 = vand.u32 %v221, 4294901760
    %v341 = vsub.f32 %v221, %v340
    %v342 = vand.u32 %v341, 4294901760
    %v343 = vsub.f32 %v341, %v342
    %v344 = vand.u32 %v343, 4294901760
    %345 = vmatmul.f32.gmra.mxu0 %v344
    %v346 = vpop.f32.mrf.mxu0
    %v347 = vadd.f32 0.0, %v346
    %v348 = vand.u32 %v224, 4294901760
    %v349 = vsub.f32 %v224, %v348
    %v350 = vand.u32 %v349, 4294901760
    %v351 = vsub.f32 %v349, %v350
    %v352 = vand.u32 %v351, 4294901760
    %353 = vmatmul.f32.gmra.mxu0 %v352
    %v354 = vpop.f32.mrf.mxu0
    %v355 = vadd.f32 0.0, %v354
    %v356 = vand.u32 %v227, 4294901760
    %v357 = vsub.f32 %v227, %v356
    %v358 = vand.u32 %v357, 4294901760
    %v359 = vsub.f32 %v357, %v358
    %v360 = vand.u32 %v359, 4294901760
    %361 = vmatmul.f32.gmra.mxu0 %v360
    %v362 = vpop.f32.mrf.mxu0
    %v363 = vadd.f32 0.0, %v362
    %v364 = vand.u32 %v230, 4294901760
    %v365 = vsub.f32 %v230, %v364
    %v366 = vand.u32 %v365, 4294901760
    %v367 = vsub.f32 %v365, %v366
    %v368 = vand.u32 %v367, 4294901760
    %369 = vmatmul.f32.gmra.mxu0 %v368
    %v370 = vpop.f32.mrf.mxu0
    %v371 = vadd.f32 0.0, %v370
    %v372 = vand.u32 %v233, 4294901760
    %v373 = vsub.f32 %v233, %v372
    %v374 = vand.u32 %v373, 4294901760
    %v375 = vsub.f32 %v373, %v374
    %v376 = vand.u32 %v375, 4294901760
    %377 = vmatmul.f32.gmra.mxu0 %v376
    %v378 = vpop.f32.mrf.mxu0
    %v379 = vadd.f32 0.0, %v378
    %v380 = vand.u32 %v236, 4294901760
    %v381 = vsub.f32 %v236, %v380
    %v382 = vand.u32 %v381, 4294901760
    %v383 = vsub.f32 %v381, %v382
    %v384 = vand.u32 %v383, 4294901760
    %385 = vmatmul.f32.gmra.mxu0 %v384
    %v386 = vpop.f32.mrf.mxu0
    %v387 = vadd.f32 0.0, %v386
    %388 = vdwg.mxu0
    %389 = vmatpush.msra.mxu0 0.0
    %390 = vmatpush.msra.mxu0 0.0
    %391 = vmatpush.msra.mxu0 0.0
    %392 = vmatpush.msra.mxu0 0.0
    %393 = vmatpush.msra.mxu0 0.0
    %394 = vmatpush.msra.mxu0 0.0
    %395 = vmatpush.msra.mxu0 0.0
    %396 = vmatpush.msra.mxu0 0.0
    %397 = vmatpush.msra.mxu0 0.0
    %398 = vmatpush.msra.mxu0 0.0
    %399 = vmatpush.msra.mxu0 0.0
    %400 = vmatpush.msra.mxu0 0.0
    %401 = vmatpush.msra.mxu0 0.0
    %402 = vmatpush.msra.mxu0 0.0
    %v403 = vand.u32 %v240, 4294901760
    %v404 = vsub.f32 %v240, %v403
    %v405 = vand.u32 %v404, 4294901760
    %v406 = vsub.f32 %v404, %v405
    %v407 = vand.u32 %v406, 4294901760
    %408 = vmatpush.msra.mxu0 %v407
    %v409 = vand.u32 %v187, 4294901760
    %v410 = vsub.f32 %v187, %v409
    %v411 = vand.u32 %v410, 4294901760
    %v412 = vsub.f32 %v410, %v411
    %v413 = vand.u32 %v412, 4294901760
    %414 = vmatpush.msra.mxu0 %v413
    %v415 = vand.u32 %v191, 4294901760
    %416 = vmatmul.f32.gmra.mxu0 %v415
    %v417 = vpop.f32.mrf.mxu0
    %v418 = vadd.f32 %v267, %v417
    %v419 = vand.u32 %v194, 4294901760
    %420 = vmatmul.f32.gmra.mxu0 %v419
    %v421 = vpop.f32.mrf.mxu0
    %v422 = vadd.f32 %v275, %v421
    %v423 = vand.u32 %v197, 4294901760
    %424 = vmatmul.f32.gmra.mxu0 %v423
    %v425 = vpop.f32.mrf.mxu0
    %v426 = vadd.f32 %v283, %v425
    %v427 = vand.u32 %v200, 4294901760
    %428 = vmatmul.f32.gmra.mxu0 %v427
    %v429 = vpop.f32.mrf.mxu0
    %v430 = vadd.f32 %v291, %v429
    %v431 = vand.u32 %v203, 4294901760
    %432 = vmatmul.f32.gmra.mxu0 %v431
    %v433 = vpop.f32.mrf.mxu0
    %v434 = vadd.f32 %v299, %v433
    %v435 = vand.u32 %v206, 4294901760
    %436 = vmatmul.f32.gmra.mxu0 %v435
    %v437 = vpop.f32.mrf.mxu0
    %v438 = vadd.f32 %v307, %v437
    %v439 = vand.u32 %v209, 4294901760
    %440 = vmatmul.f32.gmra.mxu0 %v439
    %v441 = vpop.f32.mrf.mxu0
    %v442 = vadd.f32 %v315, %v441
    %v443 = vand.u32 %v212, 4294901760
    %444 = vmatmul.f32.gmra.mxu0 %v443
    %v445 = vpop.f32.mrf.mxu0
    %v446 = vadd.f32 %v323, %v445
    %v447 = vand.u32 %v215, 4294901760
    %448 = vmatmul.f32.gmra.mxu0 %v447
    %v449 = vpop.f32.mrf.mxu0
    %v450 = vadd.f32 %v331, %v449
    %v451 = vand.u32 %v218, 4294901760
    %452 = vmatmul.f32.gmra.mxu0 %v451
    %v453 = vpop.f32.mrf.mxu0
    %v454 = vadd.f32 %v339, %v453
    %v455 = vand.u32 %v221, 4294901760
    %456 = vmatmul.f32.gmra.mxu0 %v455
    %v457 = vpop.f32.mrf.mxu0
    %v458 = vadd.f32 %v347, %v457
    %v459 = vand.u32 %v224, 4294901760
    %460 = vmatmul.f32.gmra.mxu0 %v459
    %v461 = vpop.f32.mrf.mxu0
    %v462 = vadd.f32 %v355, %v461
    %v463 = vand.u32 %v227, 4294901760
    %464 = vmatmul.f32.gmra.mxu0 %v463
    %v465 = vpop.f32.mrf.mxu0
    %v466 = vadd.f32 %v363, %v465
    %v467 = vand.u32 %v230, 4294901760
    %468 = vmatmul.f32.gmra.mxu0 %v467
    %v469 = vpop.f32.mrf.mxu0
    %v470 = vadd.f32 %v371, %v469
    %v471 = vand.u32 %v233, 4294901760
    %472 = vmatmul.f32.gmra.mxu0 %v471
    %v473 = vpop.f32.mrf.mxu0
    %v474 = vadd.f32 %v379, %v473
    %v475 = vand.u32 %v236, 4294901760
    %476 = vmatmul.f32.gmra.mxu0 %v475
    %v477 = vpop.f32.mrf.mxu0
    %v478 = vadd.f32 %v387, %v477
    %479 = vdwg.mxu0
    %480 = vmatpush.msra.mxu0 0.0
    %481 = vmatpush.msra.mxu0 0.0
    %482 = vmatpush.msra.mxu0 0.0
    %483 = vmatpush.msra.mxu0 0.0
    %484 = vmatpush.msra.mxu0 0.0
    %485 = vmatpush.msra.mxu0 0.0
    %486 = vmatpush.msra.mxu0 0.0
    %487 = vmatpush.msra.mxu0 0.0
    %488 = vmatpush.msra.mxu0 0.0
    %489 = vmatpush.msra.mxu0 0.0
    %490 = vmatpush.msra.mxu0 0.0
    %491 = vmatpush.msra.mxu0 0.0
    %492 = vmatpush.msra.mxu0 0.0
    %493 = vmatpush.msra.mxu0 0.0
    %v494 = vand.u32 %v240, 4294901760
    %v495 = vsub.f32 %v240, %v494
    %496 = vmatpush.msra.mxu0 %v495
    %v497 = vand.u32 %v187, 4294901760
    %v498 = vsub.f32 %v187, %v497
    %499 = vmatpush.msra.mxu0 %v498
    %v500 = vand.u32 %v191, 4294901760
    %v501 = vsub.f32 %v191, %v500
    %502 = vmatmul.f32.gmra.mxu0 %v501
    %v503 = vpop.f32.mrf.mxu0
    %v504 = vadd.f32 %v418, %v503
    %v505 = vand.u32 %v194, 4294901760
    %v506 = vsub.f32 %v194, %v505
    %507 = vmatmul.f32.gmra.mxu0 %v506
    %v508 = vpop.f32.mrf.mxu0
    %v509 = vadd.f32 %v422, %v508
    %v510 = vand.u32 %v197, 4294901760
    %v511 = vsub.f32 %v197, %v510
    %512 = vmatmul.f32.gmra.mxu0 %v511
    %v513 = vpop.f32.mrf.mxu0
    %v514 = vadd.f32 %v426, %v513
    %v515 = vand.u32 %v200, 4294901760
    %v516 = vsub.f32 %v200, %v515
    %517 = vmatmul.f32.gmra.mxu0 %v516
    %v518 = vpop.f32.mrf.mxu0
    %v519 = vadd.f32 %v430, %v518
    %v520 = vand.u32 %v203, 4294901760
    %v521 = vsub.f32 %v203, %v520
    %522 = vmatmul.f32.gmra.mxu0 %v521
    %v523 = vpop.f32.mrf.mxu0
    %v524 = vadd.f32 %v434, %v523
    %v525 = vand.u32 %v206, 4294901760
    %v526 = vsub.f32 %v206, %v525
    %527 = vmatmul.f32.gmra.mxu0 %v526
    %v528 = vpop.f32.mrf.mxu0
    %v529 = vadd.f32 %v438, %v528
    %v530 = vand.u32 %v209, 4294901760
    %v531 = vsub.f32 %v209, %v530
    %532 = vmatmul.f32.gmra.mxu0 %v531
    %v533 = vpop.f32.mrf.mxu0
    %v534 = vadd.f32 %v442, %v533
    %v535 = vand.u32 %v212, 4294901760
    %v536 = vsub.f32 %v212, %v535
    %537 = vmatmul.f32.gmra.mxu0 %v536
    %v538 = vpop.f32.mrf.mxu0
    %v539 = vadd.f32 %v446, %v538
    %v540 = vand.u32 %v215, 4294901760
    %v541 = vsub.f32 %v215, %v540
    %542 = vmatmul.f32.gmra.mxu0 %v541
    %v543 = vpop.f32.mrf.mxu0
    %v544 = vadd.f32 %v450, %v543
    %v545 = vand.u32 %v218, 4294901760
    %v546 = vsub.f32 %v218, %v545
    %547 = vmatmul.f32.gmra.mxu0 %v546
    %v548 = vpop.f32.mrf.mxu0
    %v549 = vadd.f32 %v454, %v548
    %v550 = vand.u32 %v221, 4294901760
    %v551 = vsub.f32 %v221, %v550
    %552 = vmatmul.f32.gmra.mxu0 %v551
    %v553 = vpop.f32.mrf.mxu0
    %v554 = vadd.f32 %v458, %v553
    %v555 = vand.u32 %v224, 4294901760
    %v556 = vsub.f32 %v224, %v555
    %557 = vmatmul.f32.gmra.mxu0 %v556
    %v558 = vpop.f32.mrf.mxu0
    %v559 = vadd.f32 %v462, %v558
    %v560 = vand.u32 %v227, 4294901760
    %v561 = vsub.f32 %v227, %v560
    %562 = vmatmul.f32.gmra.mxu0 %v561
    %v563 = vpop.f32.mrf.mxu0
    %v564 = vadd.f32 %v466, %v563
    %v565 = vand.u32 %v230, 4294901760
    %v566 = vsub.f32 %v230, %v565
    %567 = vmatmul.f32.gmra.mxu0 %v566
    %v568 = vpop.f32.mrf.mxu0
    %v569 = vadd.f32 %v470, %v568
    %v570 = vand.u32 %v233, 4294901760
    %v571 = vsub.f32 %v233, %v570
    %572 = vmatmul.f32.gmra.mxu0 %v571
    %v573 = vpop.f32.mrf.mxu0
    %v574 = vadd.f32 %v474, %v573
    %v575 = vand.u32 %v236, 4294901760
    %v576 = vsub.f32 %v236, %v575
    %577 = vmatmul.f32.gmra.mxu0 %v576
    %v578 = vpop.f32.mrf.mxu0
    %v579 = vadd.f32 %v478, %v578
    %580 = vdwg.mxu0
    %581 = vmatpush.msra.mxu0 0.0
    %582 = vmatpush.msra.mxu0 0.0
    %583 = vmatpush.msra.mxu0 0.0
    %584 = vmatpush.msra.mxu0 0.0
    %585 = vmatpush.msra.mxu0 0.0
    %586 = vmatpush.msra.mxu0 0.0
    %587 = vmatpush.msra.mxu0 0.0
    %588 = vmatpush.msra.mxu0 0.0
    %589 = vmatpush.msra.mxu0 0.0
    %590 = vmatpush.msra.mxu0 0.0
    %591 = vmatpush.msra.mxu0 0.0
    %592 = vmatpush.msra.mxu0 0.0
    %593 = vmatpush.msra.mxu0 0.0
    %594 = vmatpush.msra.mxu0 0.0
    %v595 = vand.u32 %v240, 4294901760
    %596 = vmatpush.msra.mxu0 %v595
    %v597 = vand.u32 %v187, 4294901760
    %598 = vmatpush.msra.mxu0 %v597
    %v599 = vand.u32 %v191, 4294901760
    %v600 = vsub.f32 %v191, %v599
    %v601 = vand.u32 %v600, 4294901760
    %602 = vmatmul.f32.gmra.mxu0 %v601
    %v603 = vpop.f32.mrf.mxu0
    %v604 = vadd.f32 %v504, %v603
    %v605 = vand.u32 %v194, 4294901760
    %v606 = vsub.f32 %v194, %v605
    %v607 = vand.u32 %v606, 4294901760
    %608 = vmatmul.f32.gmra.mxu0 %v607
    %v609 = vpop.f32.mrf.mxu0
    %v610 = vadd.f32 %v509, %v609
    %v611 = vand.u32 %v197, 4294901760
    %v612 = vsub.f32 %v197, %v611
    %v613 = vand.u32 %v612, 4294901760
    %614 = vmatmul.f32.gmra.mxu0 %v613
    %v615 = vpop.f32.mrf.mxu0
    %v616 = vadd.f32 %v514, %v615
    %v617 = vand.u32 %v200, 4294901760
    %v618 = vsub.f32 %v200, %v617
    %v619 = vand.u32 %v618, 4294901760
    %620 = vmatmul.f32.gmra.mxu0 %v619
    %v621 = vpop.f32.mrf.mxu0
    %v622 = vadd.f32 %v519, %v621
    %v623 = vand.u32 %v203, 4294901760
    %v624 = vsub.f32 %v203, %v623
    %v625 = vand.u32 %v624, 4294901760
    %626 = vmatmul.f32.gmra.mxu0 %v625
    %v627 = vpop.f32.mrf.mxu0
    %v628 = vadd.f32 %v524, %v627
    %v629 = vand.u32 %v206, 4294901760
    %v630 = vsub.f32 %v206, %v629
    %v631 = vand.u32 %v630, 4294901760
    %632 = vmatmul.f32.gmra.mxu0 %v631
    %v633 = vpop.f32.mrf.mxu0
    %v634 = vadd.f32 %v529, %v633
    %v635 = vand.u32 %v209, 4294901760
    %v636 = vsub.f32 %v209, %v635
    %v637 = vand.u32 %v636, 4294901760
    %638 = vmatmul.f32.gmra.mxu0 %v637
    %v639 = vpop.f32.mrf.mxu0
    %v640 = vadd.f32 %v534, %v639
    %v641 = vand.u32 %v212, 4294901760
    %v642 = vsub.f32 %v212, %v641
    %v643 = vand.u32 %v642, 4294901760
    %644 = vmatmul.f32.gmra.mxu0 %v643
    %v645 = vpop.f32.mrf.mxu0
    %v646 = vadd.f32 %v539, %v645
    %v647 = vand.u32 %v215, 4294901760
    %v648 = vsub.f32 %v215, %v647
    %v649 = vand.u32 %v648, 4294901760
    %650 = vmatmul.f32.gmra.mxu0 %v649
    %v651 = vpop.f32.mrf.mxu0
    %v652 = vadd.f32 %v544, %v651
    %v653 = vand.u32 %v218, 4294901760
    %v654 = vsub.f32 %v218, %v653
    %v655 = vand.u32 %v654, 4294901760
    %656 = vmatmul.f32.gmra.mxu0 %v655
    %v657 = vpop.f32.mrf.mxu0
    %v658 = vadd.f32 %v549, %v657
    %v659 = vand.u32 %v221, 4294901760
    %v660 = vsub.f32 %v221, %v659
    %v661 = vand.u32 %v660, 4294901760
    %662 = vmatmul.f32.gmra.mxu0 %v661
    %v663 = vpop.f32.mrf.mxu0
    %v664 = vadd.f32 %v554, %v663
    %v665 = vand.u32 %v224, 4294901760
    %v666 = vsub.f32 %v224, %v665
    %v667 = vand.u32 %v666, 4294901760
    %668 = vmatmul.f32.gmra.mxu0 %v667
    %v669 = vpop.f32.mrf.mxu0
    %v670 = vadd.f32 %v559, %v669
    %v671 = vand.u32 %v227, 4294901760
    %v672 = vsub.f32 %v227, %v671
    %v673 = vand.u32 %v672, 4294901760
    %674 = vmatmul.f32.gmra.mxu0 %v673
    %v675 = vpop.f32.mrf.mxu0
    %v676 = vadd.f32 %v564, %v675
    %v677 = vand.u32 %v230, 4294901760
    %v678 = vsub.f32 %v230, %v677
    %v679 = vand.u32 %v678, 4294901760
    %680 = vmatmul.f32.gmra.mxu0 %v679
    %v681 = vpop.f32.mrf.mxu0
    %v682 = vadd.f32 %v569, %v681
    %v683 = vand.u32 %v233, 4294901760
    %v684 = vsub.f32 %v233, %v683
    %v685 = vand.u32 %v684, 4294901760
    %686 = vmatmul.f32.gmra.mxu0 %v685
    %v687 = vpop.f32.mrf.mxu0
    %v688 = vadd.f32 %v574, %v687
    %v689 = vand.u32 %v236, 4294901760
    %v690 = vsub.f32 %v236, %v689
    %v691 = vand.u32 %v690, 4294901760
    %692 = vmatmul.f32.gmra.mxu0 %v691
    %v693 = vpop.f32.mrf.mxu0
    %v694 = vadd.f32 %v579, %v693
    %695 = vdwg.mxu0
    %696 = vmatpush.msra.mxu0 0.0
    %697 = vmatpush.msra.mxu0 0.0
    %698 = vmatpush.msra.mxu0 0.0
    %699 = vmatpush.msra.mxu0 0.0
    %700 = vmatpush.msra.mxu0 0.0
    %701 = vmatpush.msra.mxu0 0.0
    %702 = vmatpush.msra.mxu0 0.0
    %703 = vmatpush.msra.mxu0 0.0
    %704 = vmatpush.msra.mxu0 0.0
    %705 = vmatpush.msra.mxu0 0.0
    %706 = vmatpush.msra.mxu0 0.0
    %707 = vmatpush.msra.mxu0 0.0
    %708 = vmatpush.msra.mxu0 0.0
    %709 = vmatpush.msra.mxu0 0.0
    %v710 = vand.u32 %v240, 4294901760
    %v711 = vsub.f32 %v240, %v710
    %v712 = vand.u32 %v711, 4294901760
    %713 = vmatpush.msra.mxu0 %v712
    %v714 = vand.u32 %v187, 4294901760
    %v715 = vsub.f32 %v187, %v714
    %v716 = vand.u32 %v715, 4294901760
    %717 = vmatpush.msra.mxu0 %v716
    %v718 = vand.u32 %v191, 4294901760
    %719 = vmatmul.f32.gmra.mxu0 %v718
    %v720 = vpop.f32.mrf.mxu0
    %v721 = vadd.f32 %v604, %v720
    %v722 = vand.u32 %v194, 4294901760
    %723 = vmatmul.f32.gmra.mxu0 %v722
    %v724 = vpop.f32.mrf.mxu0
    %v725 = vadd.f32 %v610, %v724
    %v726 = vand.u32 %v197, 4294901760
    %727 = vmatmul.f32.gmra.mxu0 %v726
    %v728 = vpop.f32.mrf.mxu0
    %v729 = vadd.f32 %v616, %v728
    %v730 = vand.u32 %v200, 4294901760
    %731 = vmatmul.f32.gmra.mxu0 %v730
    %v732 = vpop.f32.mrf.mxu0
    %v733 = vadd.f32 %v622, %v732
    %v734 = vand.u32 %v203, 4294901760
    %735 = vmatmul.f32.gmra.mxu0 %v734
    %v736 = vpop.f32.mrf.mxu0
    %v737 = vadd.f32 %v628, %v736
    %v738 = vand.u32 %v206, 4294901760
    %739 = vmatmul.f32.gmra.mxu0 %v738
    %v740 = vpop.f32.mrf.mxu0
    %v741 = vadd.f32 %v634, %v740
    %v742 = vand.u32 %v209, 4294901760
    %743 = vmatmul.f32.gmra.mxu0 %v742
    %v744 = vpop.f32.mrf.mxu0
    %v745 = vadd.f32 %v640, %v744
    %v746 = vand.u32 %v212, 4294901760
    %747 = vmatmul.f32.gmra.mxu0 %v746
    %v748 = vpop.f32.mrf.mxu0
    %v749 = vadd.f32 %v646, %v748
    %v750 = vand.u32 %v215, 4294901760
    %751 = vmatmul.f32.gmra.mxu0 %v750
    %v752 = vpop.f32.mrf.mxu0
    %v753 = vadd.f32 %v652, %v752
    %v754 = vand.u32 %v218, 4294901760
    %755 = vmatmul.f32.gmra.mxu0 %v754
    %v756 = vpop.f32.mrf.mxu0
    %v757 = vadd.f32 %v658, %v756
    %v758 = vand.u32 %v221, 4294901760
    %759 = vmatmul.f32.gmra.mxu0 %v758
    %v760 = vpop.f32.mrf.mxu0
    %v761 = vadd.f32 %v664, %v760
    %v762 = vand.u32 %v224, 4294901760
    %763 = vmatmul.f32.gmra.mxu0 %v762
    %v764 = vpop.f32.mrf.mxu0
    %v765 = vadd.f32 %v670, %v764
    %v766 = vand.u32 %v227, 4294901760
    %767 = vmatmul.f32.gmra.mxu0 %v766
    %v768 = vpop.f32.mrf.mxu0
    %v769 = vadd.f32 %v676, %v768
    %v770 = vand.u32 %v230, 4294901760
    %771 = vmatmul.f32.gmra.mxu0 %v770
    %v772 = vpop.f32.mrf.mxu0
    %v773 = vadd.f32 %v682, %v772
    %v774 = vand.u32 %v233, 4294901760
    %775 = vmatmul.f32.gmra.mxu0 %v774
    %v776 = vpop.f32.mrf.mxu0
    %v777 = vadd.f32 %v688, %v776
    %v778 = vand.u32 %v236, 4294901760
    %779 = vmatmul.f32.gmra.mxu0 %v778
    %v780 = vpop.f32.mrf.mxu0
    %v781 = vadd.f32 %v694, %v780
    %782 = vdwg.mxu0
    %783 = vmatpush.msra.mxu0 0.0
    %784 = vmatpush.msra.mxu0 0.0
    %785 = vmatpush.msra.mxu0 0.0
    %786 = vmatpush.msra.mxu0 0.0
    %787 = vmatpush.msra.mxu0 0.0
    %788 = vmatpush.msra.mxu0 0.0
    %789 = vmatpush.msra.mxu0 0.0
    %790 = vmatpush.msra.mxu0 0.0
    %791 = vmatpush.msra.mxu0 0.0
    %792 = vmatpush.msra.mxu0 0.0
    %793 = vmatpush.msra.mxu0 0.0
    %794 = vmatpush.msra.mxu0 0.0
    %795 = vmatpush.msra.mxu0 0.0
    %796 = vmatpush.msra.mxu0 0.0
    %v797 = vand.u32 %v240, 4294901760
    %798 = vmatpush.msra.mxu0 %v797
    %v799 = vand.u32 %v187, 4294901760
    %800 = vmatpush.msra.mxu0 %v799
    %v801 = vand.u32 %v191, 4294901760
    %802 = vmatmul.f32.gmra.mxu0 %v801
    %v803 = vpop.f32.mrf.mxu0
    %v804 = vadd.f32 %v721, %v803
    %v805 = vand.u32 %v194, 4294901760
    %806 = vmatmul.f32.gmra.mxu0 %v805
    %v807 = vpop.f32.mrf.mxu0
    %v808 = vadd.f32 %v725, %v807
    %v809 = vand.u32 %v197, 4294901760
    %810 = vmatmul.f32.gmra.mxu0 %v809
    %v811 = vpop.f32.mrf.mxu0
    %v812 = vadd.f32 %v729, %v811
    %v813 = vand.u32 %v200, 4294901760
    %814 = vmatmul.f32.gmra.mxu0 %v813
    %v815 = vpop.f32.mrf.mxu0
    %v816 = vadd.f32 %v733, %v815
    %v817 = vand.u32 %v203, 4294901760
    %818 = vmatmul.f32.gmra.mxu0 %v817
    %v819 = vpop.f32.mrf.mxu0
    %v820 = vadd.f32 %v737, %v819
    %v821 = vand.u32 %v206, 4294901760
    %822 = vmatmul.f32.gmra.mxu0 %v821
    %v823 = vpop.f32.mrf.mxu0
    %v824 = vadd.f32 %v741, %v823
    %v825 = vand.u32 %v209, 4294901760
    %826 = vmatmul.f32.gmra.mxu0 %v825
    %v827 = vpop.f32.mrf.mxu0
    %v828 = vadd.f32 %v745, %v827
    %v829 = vand.u32 %v212, 4294901760
    %830 = vmatmul.f32.gmra.mxu0 %v829
    %v831 = vpop.f32.mrf.mxu0
    %v832 = vadd.f32 %v749, %v831
    %v833 = vand.u32 %v215, 4294901760
    %834 = vmatmul.f32.gmra.mxu0 %v833
    %v835 = vpop.f32.mrf.mxu0
    %v836 = vadd.f32 %v753, %v835
    %v837 = vand.u32 %v218, 4294901760
    %838 = vmatmul.f32.gmra.mxu0 %v837
    %v839 = vpop.f32.mrf.mxu0
    %v840 = vadd.f32 %v757, %v839
    %v841 = vand.u32 %v221, 4294901760
    %842 = vmatmul.f32.gmra.mxu0 %v841
    %v843 = vpop.f32.mrf.mxu0
    %v844 = vadd.f32 %v761, %v843
    %v845 = vand.u32 %v224, 4294901760
    %846 = vmatmul.f32.gmra.mxu0 %v845
    %v847 = vpop.f32.mrf.mxu0
    %v848 = vadd.f32 %v765, %v847
    %v849 = vand.u32 %v227, 4294901760
    %850 = vmatmul.f32.gmra.mxu0 %v849
    %v851 = vpop.f32.mrf.mxu0
    %v852 = vadd.f32 %v769, %v851
    %v853 = vand.u32 %v230, 4294901760
    %854 = vmatmul.f32.gmra.mxu0 %v853
    %v855 = vpop.f32.mrf.mxu0
    %v856 = vadd.f32 %v773, %v855
    %v857 = vand.u32 %v233, 4294901760
    %858 = vmatmul.f32.gmra.mxu0 %v857
    %v859 = vpop.f32.mrf.mxu0
    %v860 = vadd.f32 %v777, %v859
    %v861 = vand.u32 %v236, 4294901760
    %862 = vmatmul.f32.gmra.mxu0 %v861
    %v863 = vpop.f32.mrf.mxu0
    %v864 = vadd.f32 %v781, %v863
    %865 = vdwg.mxu0
    %vm866 = vcmask 56320
    %867 = vst.msk [vmem:[#allocation2] sm:$0xff] %vm866, %v804
    %868 = vst.msk [vmem:[#allocation2 + $0x8] sm:$0xff] %vm866, %v808
    %869 = vst.msk [vmem:[#allocation2 + $0x10] sm:$0xff] %vm866, %v812
    %870 = vst.msk [vmem:[#allocation2 + $0x18] sm:$0xff] %vm866, %v816
    %871 = vst.msk [vmem:[#allocation2 + $0x20] sm:$0xff] %vm866, %v820
    %872 = vst.msk [vmem:[#allocation2 + $0x28] sm:$0xff] %vm866, %v824
    %873 = vst.msk [vmem:[#allocation2 + $0x30] sm:$0xff] %vm866, %v828
    %874 = vst.msk [vmem:[#allocation2 + $0x38] sm:$0xff] %vm866, %v832
    %875 = vst.msk [vmem:[#allocation2 + $0x40] sm:$0xff] %vm866, %v836
    %876 = vst.msk [vmem:[#allocation2 + $0x48] sm:$0xff] %vm866, %v840
    %877 = vst.msk [vmem:[#allocation2 + $0x50] sm:$0xff] %vm866, %v844
    %878 = vst.msk [vmem:[#allocation2 + $0x58] sm:$0xff] %vm866, %v848
    %879 = vst.msk [vmem:[#allocation2 + $0x60] sm:$0xff] %vm866, %v852
    %880 = vst.msk [vmem:[#allocation2 + $0x68] sm:$0xff] %vm866, %v856
    %881 = vst.msk [vmem:[#allocation2 + $0x70] sm:$0xff] %vm866, %v860
    %882 = vst.msk [vmem:[#allocation2 + $0x78] sm:$0xff] %vm866, %v864
    %v883 = vld [vmem:[#allocation2] ss:$2 sm:$0x7f]
    %s884 = scalar_lea.vmem [#allocation2], 16
    %v885 = vld [vmem:[%s884] ss:$2 sm:$0x7f]
    %s886 = scalar_lea.vmem [#allocation2], 32
    %v887 = vld [vmem:[%s886] ss:$2 sm:$0x7f]
    %s888 = scalar_lea.vmem [#allocation2], 48
    %v889 = vld [vmem:[%s888] ss:$2 sm:$0x7f]
    %s890 = scalar_lea.vmem [#allocation2], 64
    %v891 = vld [vmem:[%s890] ss:$2 sm:$0x7f]
    %s892 = scalar_lea.vmem [#allocation2], 80
    %v893 = vld [vmem:[%s892] ss:$2 sm:$0x7f]
    %s894 = scalar_lea.vmem [#allocation2], 96
    %v895 = vld [vmem:[%s894] ss:$2 sm:$0x7f]
    %s896 = scalar_lea.vmem [#allocation2], 112
    %v897 = vld [vmem:[%s896] ss:$2 sm:$0x7f]
    %s898 = scalar_lea.vmem [#allocation2], 1
    %v899 = vld [vmem:[%s898] ss:$2 sm:$0x7f]
    %s900 = scalar_lea.vmem [#allocation2], 17
    %v901 = vld [vmem:[%s900] ss:$2 sm:$0x7f]
    %s902 = scalar_lea.vmem [#allocation2], 33
    %v903 = vld [vmem:[%s902] ss:$2 sm:$0x7f]
    %s904 = scalar_lea.vmem [#allocation2], 49
    %v905 = vld [vmem:[%s904] ss:$2 sm:$0x7f]
    %s906 = scalar_lea.vmem [#allocation2], 65
    %v907 = vld [vmem:[%s906] ss:$2 sm:$0x7f]
    %s908 = scalar_lea.vmem [#allocation2], 81
    %v909 = vld [vmem:[%s908] ss:$2 sm:$0x7f]
    %s910 = scalar_lea.vmem [#allocation2], 97
    %v911 = vld [vmem:[%s910] ss:$2 sm:$0x7f]
    %s912 = scalar_lea.vmem [#allocation2], 113
    %v913 = vld [vmem:[%s912] ss:$2 sm:$0x7f]
    %s914 = scalar_lea.vmem [#allocation2], 2
    %v915 = vld [vmem:[%s914] ss:$2 sm:$0x7f]
    %s916 = scalar_lea.vmem [#allocation2], 18
    %v917 = vld [vmem:[%s916] ss:$2 sm:$0x7f]
    %s918 = scalar_lea.vmem [#allocation2], 34
    %v919 = vld [vmem:[%s918] ss:$2 sm:$0x7f]
    %s920 = scalar_lea.vmem [#allocation2], 50
    %v921 = vld [vmem:[%s920] ss:$2 sm:$0x7f]
    %s922 = scalar_lea.vmem [#allocation2], 66
    %v923 = vld [vmem:[%s922] ss:$2 sm:$0x7f]
    %s924 = scalar_lea.vmem [#allocation2], 82
    %v925 = vld [vmem:[%s924] ss:$2 sm:$0x7f]
    %s926 = scalar_lea.vmem [#allocation2], 98
    %v927 = vld [vmem:[%s926] ss:$2 sm:$0x7f]
    %s928 = scalar_lea.vmem [#allocation2], 114
    %v929 = vld [vmem:[%s928] ss:$2 sm:$0x7f]
    %v930 = vmax.f32 %v883, %v899
    %v931 = vmax.f32 %v885, %v901
    %v932 = vmax.f32 %v887, %v903
    %v933 = vmax.f32 %v889, %v905
    %v934 = vmax.f32 %v891, %v907
    %v935 = vmax.f32 %v893, %v909
    %v936 = vmax.f32 %v895, %v911
    %v937 = vmax.f32 %v897, %v913
    %v938 = vmax.f32 %v930, %v915
    %v939 = vmax.f32 %v931, %v917
    %v940 = vmax.f32 %v932, %v919
    %v941 = vmax.f32 %v933, %v921
    %v942 = vmax.f32 %v934, %v923
    %v943 = vmax.f32 %v935, %v925
    %v944 = vmax.f32 %v936, %v927
    %v945 = vmax.f32 %v937, %v929
    %vm946 = vcmask 55296
    %947 = vst.msk [vmem:[%s2] sm:$0x7f] %vm946, %v938
    %948 = vst.msk [vmem:[%s2 + $0x8] sm:$0x7f] %vm946, %v939
    %949 = vst.msk [vmem:[%s2 + $0x10] sm:$0x7f] %vm946, %v940
    %950 = vst.msk [vmem:[%s2 + $0x18] sm:$0x7f] %vm946, %v941
    %951 = vst.msk [vmem:[%s2 + $0x20] sm:$0x7f] %vm946, %v942
    %952 = vst.msk [vmem:[%s2 + $0x28] sm:$0x7f] %vm946, %v943
    %953 = vst.msk [vmem:[%s2 + $0x30] sm:$0x7f] %vm946, %v944
    %954 = vst.msk [vmem:[%s2 + $0x38] sm:$0x7f] %vm946, %v945
    // Predicated region
    $region14: #{tpu_custom_call.1} parent=1 // pred_check
      _
    $region15: #{tpu_custom_call.1} parent=1 // pred_check_branch
      %956 = sbr.rel (0) target = $region17
    $region16: #{tpu_custom_call.1} parent=1 // pred_region
      _
    $region17: #{tpu_custom_call.1} parent=1 // pred_fallthru
      _
    // Predicated region
    $region18: #{tpu_custom_call.1} parent=1 // pred_check
      _
    $region19: #{tpu_custom_call.1} parent=1 // pred_check_branch
      %958 = sbr.rel (0) target = $region21
    $region20: #{tpu_custom_call.1} parent=1 // pred_region
      _
    $region21: #{tpu_custom_call.1} parent=1 // pred_fallthru
      _
    %959 = vsyncpa [#allocation4], 1

</llo_original>
